<compile_context>
chip_gen: v6e
topology: v6e:2x2x1
jax: 0.10.0
libtpu: 0.0.40
codegen_flags: <defaults>
</compile_context>

<pallas_src>
import jax
import jax.numpy as jnp
from jax.experimental import pallas as pl
from jax.experimental.pallas import tpu as pltpu


_TINY_ELEMS = 4096               # below this, plain XLA beats a custom call
_TARGET_ROWS = 4096              # 4096 x 128 f32 = 2 MiB payload per block
_VMEM_LIMIT = 32 * 1024 * 1024   # explicit scoped-VMEM budget (safe on v5e..v7x)


def _round_up(x, m):
    return ((x + m - 1) // m) * m


# -----------------------------------------------------------------------------
# Lane-dense kernel (p divides 128): x is presented as (rows, 128) with the
# batch axis on lanes; a single MXU matmul against the block-diagonal matrix
# S = kron(I_G, a^T) (shape (128, G), G = 128/p) performs both the multiply by
# the AR coefficients and the per-batch-element reduction.
# -----------------------------------------------------------------------------
def _ar_lane_dense_kernel(x_ref, s_ref, bias_ref, o_ref):
    # x_ref: (rows, 128) VMEM; s_ref: (128, G) VMEM; bias_ref: (1, 1) SMEM;
    # o_ref: (rows, G) VMEM float32 (row-major == batch order).
    x = x_ref[...].astype(jnp.float32)
    dots = jnp.dot(x, s_ref[...], preferred_element_type=jnp.float32)
    o_ref[...] = bias_ref[0, 0] - dots


# -----------------------------------------------------------------------------
# Generic fallback (p not a divisor of 128): original (B, p) layout, VPU
# multiply + lane-axis reduce, lane-dense (1, b_tile) output row.
# -----------------------------------------------------------------------------
def _ar_generic_kernel(x_ref, a_ref, bias_ref, o_ref):
    x = x_ref[...].astype(jnp.float32)            # (bt, p)
    a = a_ref[...].astype(jnp.float32)            # (1, p), broadcast over rows
    s = jnp.sum(x * a, axis=1)                    # (bt,)
    o_ref[...] = jnp.reshape(bias_ref[0, 0] - s, (1, -1))


def _ar_forward_lane_dense(x_past, a32, bias32, B, p):
    G = 128 // p                                  # batch elements per 128-lane row
    B_pad = _round_up(B, G)
    if B_pad != B:
        # Rare ragged tail: zero-pad a few batch rows so the metadata-only
        # reshape below is exact; the padded outputs are sliced off.
        x_past = jnp.pad(x_past, ((0, B_pad - B), (0, 0)))
    R = (B_pad * p) // 128
    x_r = x_past.reshape(R, 128)                  # zero-cost, row-major

    # Block-diagonal coefficients: S[i, j] = a[i % p] if i // p == j else 0.
    S = jnp.kron(jnp.eye(G, dtype=jnp.float32), a32.reshape(p, 1))   # (128, G)

    out_shape = jax.ShapeDtypeStruct((R, G), jnp.float32)

    if R <= _TARGET_ROWS:
        # Whole problem fits one ~<=2 MiB block: single un-gridded call.
        out_r = pl.pallas_call(
            _ar_lane_dense_kernel,
            out_shape=out_shape,
            in_specs=[
                pl.BlockSpec(memory_space=pltpu.MemorySpace.VMEM),   # x_r
                pl.BlockSpec(memory_space=pltpu.MemorySpace.VMEM),   # S
                pl.BlockSpec(memory_space=pltpu.MemorySpace.SMEM),   # bias
            ],
            out_specs=pl.BlockSpec(memory_space=pltpu.MemorySpace.VMEM),
        )(x_r, S, bias32)
    else:
        # R > _TARGET_ROWS  =>  at least 2 grid steps (v7x megacore sharding).
        grid = (pl.cdiv(R, _TARGET_ROWS),)
        out_r = pl.pallas_call(
            _ar_lane_dense_kernel,
            out_shape=out_shape,
            grid=grid,
            in_specs=[
                pl.BlockSpec((_TARGET_ROWS, 128), lambda i: (i, 0)),  # x_r (streamed)
                pl.BlockSpec((128, G), lambda i: (0, 0)),             # S (resident)
                pl.BlockSpec(memory_space=pltpu.MemorySpace.SMEM),    # bias (scalar)
            ],
            out_specs=pl.BlockSpec((_TARGET_ROWS, G), lambda i: (i, 0)),
            compiler_params=pltpu.CompilerParams(
                dimension_semantics=("parallel",),
                vmem_limit_bytes=_VMEM_LIMIT,
            ),
        )(x_r, S, bias32)

    # (R, G) row-major is exactly batch order: free reshape + cheap slice.
    return out_r.reshape(-1)[:B].reshape(B, 1)


def _ar_forward_generic(x_past, a32, bias32, B, p):
    # Lane padding is physical: a (bt, p) block occupies bt * roundup(p,128)
    # f32 words of VMEM regardless of p, so budget on the padded size.
    p_pad = _round_up(p, 128)
    bt = (2 * 1024 * 1024) // (p_pad * 4)         # ~2 MiB padded per input buffer
    bt = max(128, min(4096, (bt // 128) * 128))   # multiple of 128 -> dense vst

    out_shape = jax.ShapeDtypeStruct((1, B), jnp.float32)

    if B <= bt:
        out = pl.pallas_call(
            _ar_generic_kernel,
            out_shape=out_shape,
            in_specs=[
                pl.BlockSpec(memory_space=pltpu.MemorySpace.VMEM),   # x_past
                pl.BlockSpec(memory_space=pltpu.MemorySpace.VMEM),   # a
                pl.BlockSpec(memory_space=pltpu.MemorySpace.SMEM),   # bias
            ],
            out_specs=pl.BlockSpec(memory_space=pltpu.MemorySpace.VMEM),
        )(x_past, a32, bias32)
    else:
        grid = (pl.cdiv(B, bt),)
        out = pl.pallas_call(
            _ar_generic_kernel,
            out_shape=out_shape,
            grid=grid,
            in_specs=[
                pl.BlockSpec((bt, p), lambda i: (i, 0)),              # x_past
                pl.BlockSpec((1, p), lambda i: (0, 0)),               # a (resident)
                pl.BlockSpec(memory_space=pltpu.MemorySpace.SMEM),    # bias
            ],
            out_specs=pl.BlockSpec((1, bt), lambda i: (0, i)),
            compiler_params=pltpu.CompilerParams(
                dimension_semantics=("parallel",),
                vmem_limit_bytes=_VMEM_LIMIT,
            ),
        )(x_past, a32, bias32)
    return out.reshape(B, 1)


def ar_forward(x_past, a, bias):
    """AR(p) forward: returns (B, 1) float32, bias - <x_past, a> per row."""
    B, p = x_past.shape
    a32 = a.astype(jnp.float32)
    bias32 = bias.astype(jnp.float32)

    # Tiny problems: custom-call + DMA setup dwarfs the work -> plain XLA.
    if B * p <= _TINY_ELEMS:
        return bias32 - jnp.sum(x_past.astype(jnp.float32) * a32,
                                axis=1, keepdims=True)

    if p <= 128 and 128 % p == 0:
        return _ar_forward_lane_dense(x_past, a32, bias32, B, p)
    return _ar_forward_generic(x_past, a32, bias32, B, p)


if __name__ == "__main__":
    key = jax.random.PRNGKey(0)
    k_a, k1, k2, k3, k4, k5 = jax.random.split(key, 6)

    def ref_fn(x, a, bias):
        return (-jnp.sum(x.astype(jnp.float32) * a.astype(jnp.float32),
                         axis=1, keepdims=True) + bias.astype(jnp.float32))

    # Module-consistent parameters: a (1, p), bias (1, 1).  Inputs are drawn
    # as bf16-representable values so the check is exact regardless of the
    # platform's f32-matmul pass count on the MXU.
    P = 4
    a = jax.random.normal(k_a, (1, P), dtype=jnp.bfloat16).astype(jnp.float32)
    bias = jnp.zeros((1, 1), dtype=jnp.float32)

    # 1) Tiny demo shape from the module spec: x_past (BATCH=8, p=4) -> XLA path.
    x_small = jax.random.normal(k1, (8, P), dtype=jnp.bfloat16).astype(jnp.float32)
    out = jax.block_until_ready(ar_forward(x_small, a, bias))
    assert out.shape == (8, 1)
    assert jnp.allclose(out, ref_fn(x_small, a, bias), atol=1e-5, rtol=1e-5)

    # 2) Lane-dense Pallas kernel, single un-gridded call.
    x_mid = jax.random.normal(k2, (4096, P), dtype=jnp.bfloat16).astype(jnp.float32)
    out = jax.block_until_ready(ar_forward(x_mid, a, bias))
    assert out.shape == (4096, 1)
    assert jnp.allclose(out, ref_fn(x_mid, a, bias), atol=1e-5, rtol=1e-5)

    # 3) Lane-dense Pallas kernel, gridded (>= 2 parallel steps), ragged batch,
    #    bf16 input (half the HBM read).
    x_big = jax.random.normal(k3, (200003, P), dtype=jnp.bfloat16)
    out = jax.block_until_ready(ar_forward(x_big, a, bias))
    assert out.shape == (200003, 1)
    assert jnp.allclose(out, ref_fn(x_big, a, bias), atol=1e-5, rtol=1e-5)

    # 4) Generic fallback (p does not divide 128), gridded path.
    P2 = 5
    a2 = jax.random.normal(k4, (1, P2), dtype=jnp.float32)
    x_gen = jax.random.normal(k5, (10000, P2), dtype=jnp.float32)
    out = jax.block_until_ready(ar_forward(x_gen, a2, bias))
    assert out.shape == (10000, 1)
    assert jnp.allclose(out, ref_fn(x_gen, a2, bias), atol=1e-4, rtol=1e-4)

    print("KERNEL_OK")
</pallas_src>

<mosaic_0001>
module attributes {stable_mosaic.version = 11 : i64} {
  func.func @_ar_lane_dense_kernel(%arg0: memref<128x128xf32, #tpu.memory_space<vmem>>, %arg1: memref<128x32xf32, #tpu.memory_space<vmem>>, %arg2: memref<1x1xf32, #tpu.memory_space<smem>>, %arg3: memref<128x32xf32, #tpu.memory_space<vmem>>) attributes {dimension_semantics = [], scalar_prefetch = 0 : i64, scratch_operands = 0 : i64, tpu.core_type = #tpu.core_type<tc>} {
    %c0 = arith.constant 0 : index
    %c0_0 = arith.constant 0 : index
    %0 = vector.load %arg0[%c0, %c0_0] : memref<128x128xf32, #tpu.memory_space<vmem>>, vector<128x128xf32>
    %c0_1 = arith.constant 0 : index
    %c0_2 = arith.constant 0 : index
    %1 = vector.load %arg1[%c0_1, %c0_2] : memref<128x32xf32, #tpu.memory_space<vmem>>, vector<128x32xf32>
    %cst = arith.constant dense<0.000000e+00> : vector<128x32xf32>
    %2 = tpu.matmul %0, %1, %cst {dimension_numbers = #tpu.dot_dimension_numbers<[1], [0], [0], [1], [0, 0, 1, 1], [], []>} : vector<128x128xf32>, vector<128x32xf32>, vector<128x32xf32> -> vector<128x32xf32>
    %c0_3 = arith.constant 0 : index
    %c0_4 = arith.constant 0 : index
    %3 = memref.load %arg2[%c0_3, %c0_4] : memref<1x1xf32, #tpu.memory_space<smem>>
    %4 = vector.broadcast %3 : f32 to vector<128x32xf32>
    %5 = arith.subf %4, %2 : vector<128x32xf32>
    %c0_5 = arith.constant 0 : index
    %c0_6 = arith.constant 0 : index
    %6 = vector.load %arg3[%c0_5, %c0_6] : memref<128x32xf32, #tpu.memory_space<vmem>>, vector<128x32xf32>
    tpu.vector_store %arg3[%c0_5, %c0_6], %5 {strides = array<i32>} : memref<128x32xf32, #tpu.memory_space<vmem>>, vector<128x32xf32>,
    return
  }
}

</mosaic_0001>

<llo_original>
// kernel: tpu_custom_call.1
$region0: #{tpu_custom_call.1}
  #allocation0 [shape = 'u32[]', space=smem, size = 0x4, offset = 0x4, fixed_abs, tag = 'smem constant byte address 0x4 - core index']
  #allocation1 [shape = 'u32[144,128]{1,0:T(1,128)}', space=vmem, size = 0x12000, scoped, tag = 'internal scratch']
  #allocation2 [shape = 'f32[1,1]{1,0:T(1,128)S(6)}', space=smem, size = 0x200, scoped, tag = 'scoped memory for tpu_custom_call.1']
  %s0 = inlined_call_operand.vmem [shape: f32[128,128], index: 0, kind: input, shape index: {}]
  %s1 = inlined_call_operand.vmem [shape: f32[128,32], index: 1, kind: input, shape index: {}]
  %s2 = inlined_call_operand.<no memory space> [shape: f32[1,1], index: 2, kind: input, shape index: {}]
  %s3 = inlined_call_operand.vmem [shape: f32[128,32], index: 3, kind: output, shape index: {}]
  %s4 = sld [smem:[#allocation0]]
  $region22: #{tpu_custom_call.1} parent=0
    _
  %s6 = ssub.s32 1, %s4
  %s7 = scalar_select 0, %s6, %s4
  %8 = sst [smem:[#allocation2]] %s2
  // Predicated region
  $region2: #{tpu_custom_call.1} parent=0 // pred_check
    _
  $region3: #{tpu_custom_call.1} parent=0 // pred_check_branch
    %10 = sbr.rel (0) target = $region5
  $region4: #{tpu_custom_call.1} parent=0 // pred_region
    _
  $region5: #{tpu_custom_call.1} parent=0 // pred_fallthru
    _
  // Predicated region
  $region6: #{tpu_custom_call.1} parent=0 // pred_check
    _
  $region7: #{tpu_custom_call.1} parent=0 // pred_check_branch
    %12 = sbr.rel (0) target = $region9
  $region8: #{tpu_custom_call.1} parent=0 // pred_region
    _
  $region9: #{tpu_custom_call.1} parent=0 // pred_fallthru
    _
  // Predicated region
  $region10: #{tpu_custom_call.1} parent=0 // pred_check
    _
  $region11: #{tpu_custom_call.1} parent=0 // pred_check_branch
    %14 = sbr.rel (0) target = $region13
  $region12: #{tpu_custom_call.1} parent=0 // pred_region
    _
  $region13: #{tpu_custom_call.1} parent=0 // pred_fallthru
    _
  %v15 = vld [vmem:[%s0] sm:$0xff]
  %v16 = vld [vmem:[%s0 + $0x8] sm:$0xff]
  %v17 = vld [vmem:[%s0 + $0x10] sm:$0xff]
  %v18 = vld [vmem:[%s0 + $0x18] sm:$0xff]
  %v19 = vld [vmem:[%s0 + $0x20] sm:$0xff]
  %v20 = vld [vmem:[%s0 + $0x28] sm:$0xff]
  %v21 = vld [vmem:[%s0 + $0x30] sm:$0xff]
  %v22 = vld [vmem:[%s0 + $0x38] sm:$0xff]
  %v23 = vld [vmem:[%s0 + $0x40] sm:$0xff]
  %v24 = vld [vmem:[%s0 + $0x48] sm:$0xff]
  %v25 = vld [vmem:[%s0 + $0x50] sm:$0xff]
  %v26 = vld [vmem:[%s0 + $0x58] sm:$0xff]
  %v27 = vld [vmem:[%s0 + $0x60] sm:$0xff]
  %v28 = vld [vmem:[%s0 + $0x68] sm:$0xff]
  %v29 = vld [vmem:[%s0 + $0x70] sm:$0xff]
  %v30 = vld [vmem:[%s0 + $0x78] sm:$0xff]
  %v31 = vld [vmem:[%s1] sm:$0xff]
  %v32 = vld [vmem:[%s1 + $0x8] sm:$0xff]
  %v33 = vld [vmem:[%s1 + $0x10] sm:$0xff]
  %v34 = vld [vmem:[%s1 + $0x18] sm:$0xff]
  %v35 = vld [vmem:[%s1 + $0x20] sm:$0xff]
  %v36 = vld [vmem:[%s1 + $0x28] sm:$0xff]
  %v37 = vld [vmem:[%s1 + $0x30] sm:$0xff]
  %v38 = vld [vmem:[%s1 + $0x38] sm:$0xff]
  %v39 = vld [vmem:[%s1 + $0x40] sm:$0xff]
  %v40 = vld [vmem:[%s1 + $0x48] sm:$0xff]
  %v41 = vld [vmem:[%s1 + $0x50] sm:$0xff]
  %v42 = vld [vmem:[%s1 + $0x58] sm:$0xff]
  %v43 = vld [vmem:[%s1 + $0x60] sm:$0xff]
  %v44 = vld [vmem:[%s1 + $0x68] sm:$0xff]
  %v45 = vld [vmem:[%s1 + $0x70] sm:$0xff]
  %v46 = vld [vmem:[%s1 + $0x78] sm:$0xff]
  %47 = vmatprep.subr.mxu0 0.0
  %48 = vmatpush1.msra.mxu0 %v46
  %49 = vmatprep.subr.mxu0 0.0
  %50 = vmatpush1.msra.mxu0 %v45
  %51 = vmatprep.subr.mxu0 0.0
  %52 = vmatpush1.msra.mxu0 %v44
  %53 = vmatprep.subr.mxu0 0.0
  %54 = vmatpush1.msra.mxu0 %v43
  %55 = vmatprep.subr.mxu0 0.0
  %56 = vmatpush1.msra.mxu0 %v42
  %57 = vmatprep.subr.mxu0 0.0
  %58 = vmatpush1.msra.mxu0 %v41
  %59 = vmatprep.subr.mxu0 0.0
  %60 = vmatpush1.msra.mxu0 %v40
  %61 = vmatprep.subr.mxu0 0.0
  %62 = vmatpush1.msra.mxu0 %v39
  %63 = vmatprep.subr.mxu0 0.0
  %64 = vmatpush1.msra.mxu0 %v38
  %65 = vmatprep.subr.mxu0 0.0
  %66 = vmatpush1.msra.mxu0 %v37
  %67 = vmatprep.subr.mxu0 0.0
  %68 = vmatpush1.msra.mxu0 %v36
  %69 = vmatprep.subr.mxu0 0.0
  %70 = vmatpush1.msra.mxu0 %v35
  %71 = vmatprep.subr.mxu0 0.0
  %72 = vmatpush1.msra.mxu0 %v34
  %73 = vmatprep.subr.mxu0 0.0
  %74 = vmatpush1.msra.mxu0 %v33
  %75 = vmatprep.subr.mxu0 0.0
  %76 = vmatpush1.msra.mxu0 %v32
  %77 = vmatprep.subr.mxu0 0.0
  %78 = vmatpush1.msra.mxu0 %v31
  %79 = vmatprep.subr.mxu0 0.0
  %80 = vmatpush2.msra.mxu0 0.0
  %81 = vmatprep.subr.mxu0 0.0
  %82 = vmatpush2.msra.mxu0 0.0
  %83 = vmatprep.subr.mxu0 0.0
  %84 = vmatpush2.msra.mxu0 0.0
  %85 = vmatprep.subr.mxu0 0.0
  %86 = vmatpush2.msra.mxu0 0.0
  %87 = vmatprep.subr.mxu0 0.0
  %88 = vmatpush2.msra.mxu0 0.0
  %89 = vmatprep.subr.mxu0 0.0
  %90 = vmatpush2.msra.mxu0 0.0
  %91 = vmatprep.subr.mxu0 0.0
  %92 = vmatpush2.msra.mxu0 0.0
  %93 = vmatprep.subr.mxu0 0.0
  %94 = vmatpush2.msra.mxu0 0.0
  %95 = vmatprep.subr.mxu0 0.0
  %96 = vmatpush2.msra.mxu0 0.0
  %97 = vmatprep.subr.mxu0 0.0
  %98 = vmatpush2.msra.mxu0 0.0
  %99 = vmatprep.subr.mxu0 0.0
  %100 = vmatpush2.msra.mxu0 0.0
  %101 = vmatprep.subr.mxu0 0.0
  %102 = vmatpush2.msra.mxu0 0.0
  %103 = vmatprep.subr.mxu0 0.0
  %104 = vmatpush2.msra.mxu0 0.0
  %105 = vmatprep.subr.mxu0 0.0
  %106 = vmatpush2.msra.mxu0 0.0
  %107 = vmatprep.subr.mxu0 0.0
  %108 = vmatpush2.msra.mxu0 0.0
  %109 = vmatprep.subr.mxu0 0.0
  %110 = vmatpush2.msra.mxu0 0.0
  %111 = vmatprep.mubr.f32.mxu0 0.0
  %112 = vmatmul.mubr.f32.gmra.mxu0 %v15
  %v113 = vpop.f32.mrf.mxu0
  %v114 = vadd.f32 0.0, %v113
  %v115 = vpop.f32.mrf.mxu0
  %116 = vmatprep.mubr.f32.mxu0 0.0
  %117 = vmatmul.mubr.f32.gmra.mxu0 %v16
  %v118 = vpop.f32.mrf.mxu0
  %v119 = vadd.f32 0.0, %v118
  %v120 = vpop.f32.mrf.mxu0
  %121 = vmatprep.mubr.f32.mxu0 0.0
  %122 = vmatmul.mubr.f32.gmra.mxu0 %v17
  %v123 = vpop.f32.mrf.mxu0
  %v124 = vadd.f32 0.0, %v123
  %v125 = vpop.f32.mrf.mxu0
  %126 = vmatprep.mubr.f32.mxu0 0.0
  %127 = vmatmul.mubr.f32.gmra.mxu0 %v18
  %v128 = vpop.f32.mrf.mxu0
  %v129 = vadd.f32 0.0, %v128
  %v130 = vpop.f32.mrf.mxu0
  %131 = vmatprep.mubr.f32.mxu0 0.0
  %132 = vmatmul.mubr.f32.gmra.mxu0 %v19
  %v133 = vpop.f32.mrf.mxu0
  %v134 = vadd.f32 0.0, %v133
  %v135 = vpop.f32.mrf.mxu0
  %136 = vmatprep.mubr.f32.mxu0 0.0
  %137 = vmatmul.mubr.f32.gmra.mxu0 %v20
  %v138 = vpop.f32.mrf.mxu0
  %v139 = vadd.f32 0.0, %v138
  %v140 = vpop.f32.mrf.mxu0
  %141 = vmatprep.mubr.f32.mxu0 0.0
  %142 = vmatmul.mubr.f32.gmra.mxu0 %v21
  %v143 = vpop.f32.mrf.mxu0
  %v144 = vadd.f32 0.0, %v143
  %v145 = vpop.f32.mrf.mxu0
  %146 = vmatprep.mubr.f32.mxu0 0.0
  %147 = vmatmul.mubr.f32.gmra.mxu0 %v22
  %v148 = vpop.f32.mrf.mxu0
  %v149 = vadd.f32 0.0, %v148
  %v150 = vpop.f32.mrf.mxu0
  %151 = vmatprep.mubr.f32.mxu0 0.0
  %152 = vmatmul.mubr.f32.gmra.mxu0 %v23
  %v153 = vpop.f32.mrf.mxu0
  %v154 = vadd.f32 0.0, %v153
  %v155 = vpop.f32.mrf.mxu0
  %156 = vmatprep.mubr.f32.mxu0 0.0
  %157 = vmatmul.mubr.f32.gmra.mxu0 %v24
  %v158 = vpop.f32.mrf.mxu0
  %v159 = vadd.f32 0.0, %v158
  %v160 = vpop.f32.mrf.mxu0
  %161 = vmatprep.mubr.f32.mxu0 0.0
  %162 = vmatmul.mubr.f32.gmra.mxu0 %v25
  %v163 = vpop.f32.mrf.mxu0
  %v164 = vadd.f32 0.0, %v163
  %v165 = vpop.f32.mrf.mxu0
  %166 = vmatprep.mubr.f32.mxu0 0.0
  %167 = vmatmul.mubr.f32.gmra.mxu0 %v26
  %v168 = vpop.f32.mrf.mxu0
  %v169 = vadd.f32 0.0, %v168
  %v170 = vpop.f32.mrf.mxu0
  %171 = vmatprep.mubr.f32.mxu0 0.0
  %172 = vmatmul.mubr.f32.gmra.mxu0 %v27
  %v173 = vpop.f32.mrf.mxu0
  %v174 = vadd.f32 0.0, %v173
  %v175 = vpop.f32.mrf.mxu0
  %176 = vmatprep.mubr.f32.mxu0 0.0
  %177 = vmatmul.mubr.f32.gmra.mxu0 %v28
  %v178 = vpop.f32.mrf.mxu0
  %v179 = vadd.f32 0.0, %v178
  %v180 = vpop.f32.mrf.mxu0
  %181 = vmatprep.mubr.f32.mxu0 0.0
  %182 = vmatmul.mubr.f32.gmra.mxu0 %v29
  %v183 = vpop.f32.mrf.mxu0
  %v184 = vadd.f32 0.0, %v183
  %v185 = vpop.f32.mrf.mxu0
  %186 = vmatprep.mubr.f32.mxu0 0.0
  %187 = vmatmul.mubr.f32.gmra.mxu0 %v30
  %v188 = vpop.f32.mrf.mxu0
  %v189 = vadd.f32 0.0, %v188
  %v190 = vpop.f32.mrf.mxu0
  %191 = vdwg.mxu0
  %s192 = sld [smem:[#allocation2]]
  %v193 = vstv %s192
  %v194 = vsub.f32 %v193, %v114
  %v195 = vsub.f32 %v193, %v119
  %v196 = vsub.f32 %v193, %v124
  %v197 = vsub.f32 %v193, %v129
  %v198 = vsub.f32 %v193, %v134
  %v199 = vsub.f32 %v193, %v139
  %v200 = vsub.f32 %v193, %v144
  %v201 = vsub.f32 %v193, %v149
  %v202 = vsub.f32 %v193, %v154
  %v203 = vsub.f32 %v193, %v159
  %v204 = vsub.f32 %v193, %v164
  %v205 = vsub.f32 %v193, %v169
  %v206 = vsub.f32 %v193, %v174
  %v207 = vsub.f32 %v193, %v179
  %v208 = vsub.f32 %v193, %v184
  %v209 = vsub.f32 %v193, %v189
  %vm210 = vcmask 261120
  %211 = vst.msk [vmem:[%s3] sm:$0xff] %vm210, %v194
  %212 = vst.msk [vmem:[%s3 + $0x8] sm:$0xff] %vm210, %v195
  %213 = vst.msk [vmem:[%s3 + $0x10] sm:$0xff] %vm210, %v196
  %214 = vst.msk [vmem:[%s3 + $0x18] sm:$0xff] %vm210, %v197
  %215 = vst.msk [vmem:[%s3 + $0x20] sm:$0xff] %vm210, %v198
  %216 = vst.msk [vmem:[%s3 + $0x28] sm:$0xff] %vm210, %v199
  %217 = vst.msk [vmem:[%s3 + $0x30] sm:$0xff] %vm210, %v200
  %218 = vst.msk [vmem:[%s3 + $0x38] sm:$0xff] %vm210, %v201
  %219 = vst.msk [vmem:[%s3 + $0x40] sm:$0xff] %vm210, %v202
  %220 = vst.msk [vmem:[%s3 + $0x48] sm:$0xff] %vm210, %v203
  %221 = vst.msk [vmem:[%s3 + $0x50] sm:$0xff] %vm210, %v204
  %222 = vst.msk [vmem:[%s3 + $0x58] sm:$0xff] %vm210, %v205
  %223 = vst.msk [vmem:[%s3 + $0x60] sm:$0xff] %vm210, %v206
  %224 = vst.msk [vmem:[%s3 + $0x68] sm:$0xff] %vm210, %v207
  %225 = vst.msk [vmem:[%s3 + $0x70] sm:$0xff] %vm210, %v208
  %226 = vst.msk [vmem:[%s3 + $0x78] sm:$0xff] %vm210, %v209
  // Predicated region
  $region14: #{tpu_custom_call.1} parent=0 // pred_check
    _
  $region15: #{tpu_custom_call.1} parent=0 // pred_check_branch
    %228 = sbr.rel (0) target = $region17
  $region16: #{tpu_custom_call.1} parent=0 // pred_region
    _
  $region17: #{tpu_custom_call.1} parent=0 // pred_fallthru
    _
  // Predicated region
  $region18: #{tpu_custom_call.1} parent=0 // pred_check
    _
  $region19: #{tpu_custom_call.1} parent=0 // pred_check_branch
    %230 = sbr.rel (0) target = $region21
  $region20: #{tpu_custom_call.1} parent=0 // pred_region
    _
  $region21: #{tpu_custom_call.1} parent=0 // pred_fallthru
    _

</llo_original>
